<compile_context>
chip_gen: v5e
topology: v5e:2x2
jax: 0.10.0
libtpu: 0.0.40
codegen_flags: <defaults>
</compile_context>

<pallas_src>
import functools

import jax
import jax.numpy as jnp
from jax.experimental import pallas as pl
from jax.experimental.pallas import tpu as pltpu


def _cl_criterion_kernel(poi_ref, usr_ref, w_ref, seg_ref, out_ref, *,
                         num_candidates, valid_rows):
    # poi_ref : (TM, Dp)          query features
    # usr_ref : (TM, N*Du)        lane-dense candidate features (cand 0 = positive)
    # w_ref   : (Dp, Du)          nn.Linear(user_dim, poi_dim, bias=False).weight, as-is
    # seg_ref : (N*Du, N)         segment-sum (block one-hot) matrix
    # out_ref : (1, 8, 128)       per-tile partial loss sum (scalar broadcast)
    n = num_candidates

    q = poi_ref[...]
    w = w_ref[...]
    # <q, W u> == <q @ W, u>: single well-shaped MXU matmul per tile, f32 accum.
    qproj = jnp.dot(q, w, preferred_element_type=jnp.float32)          # (TM, Du)

    u = usr_ref[...].astype(jnp.float32)                                # (TM, N*Du)
    q_rep = jnp.concatenate([qproj] * n, axis=-1)                       # (TM, N*Du)
    prod = u * q_rep                                                    # VPU, lane-dense

    # Segmented reduce over each Du chunk via a tiny MXU matmul -> logits (TM, N).
    logits = jnp.dot(prod, seg_ref[...], preferred_element_type=jnp.float32)

    # Numerically stable cross entropy with label 0 for every row.
    row_max = jnp.max(logits, axis=-1, keepdims=True)                   # (TM, 1)
    sumexp = jnp.sum(jnp.exp(logits - row_max), axis=-1, keepdims=True)
    lse = row_max + jnp.log(sumexp)                                     # (TM, 1)
    loss_rows = lse - logits[:, 0:1]                                    # (TM, 1)

    if valid_rows is not None:
        # Padded rows (global index >= valid_rows) contribute zero.
        tm = loss_rows.shape[0]
        base = pl.program_id(0) * tm
        row_ids = base + jax.lax.broadcasted_iota(jnp.int32, (tm, 1), 0)
        loss_rows = jnp.where(row_ids < valid_rows, loss_rows, 0.0)

    out_ref[...] = jnp.full(out_ref.shape, jnp.sum(loss_rows), dtype=jnp.float32)


def _vmem_row_cap(N, Du, Dp, in_bytes, w_bytes, vmem_limit_bytes):
    """Largest tile_m (multiple of 8) whose working set fits the VMEM budget."""
    # Resident weight + segment matrix (double-buffered by the pipeline) + output.
    fixed = 2 * w_bytes * Dp * Du + 2 * 4 * (N * Du) * N + 2 * 4 * 8 * 128
    # Per-row: double-buffered input block + f32 intermediates (u, q_rep, prod)
    # on the candidate lanes, plus the query block and its f32 projection.
    per_row = (N * Du) * (2 * in_bytes + 12) + Dp * (2 * in_bytes + 4) + 4 * N
    budget = int(0.6 * vmem_limit_bytes) - fixed
    cap = budget // max(per_row, 1)
    return max(8, min(2048, (cap // 8) * 8))


def _pick_tile_m(M, cap):
    """Return (tile_m, pad_rows). Prefer an exact divisor; else pad + mask."""
    if M <= cap:
        return M, 0                      # single tile (block == full dim is legal)
    t = (cap // 8) * 8
    while t >= 8:
        if M % t == 0:
            return t, 0                  # exact multiple-of-8 divisor
        t -= 8
    tile = max(8, (cap // 8) * 8)
    return tile, (-M) % tile             # fall back to zero padding + row mask


def cl_criterion_loss(poi_history_feature, user_history_feature, weight, *,
                      tile_m=None, vmem_limit_bytes=32 * 1024 * 1024):
    """Contrastive CE loss with label 0.

    poi_history_feature : (B, S, Dp)
    user_history_feature: (B, S, N, Du)   candidate 0 is the positive
    weight              : (Dp, Du)        nn.Linear(user_dim, poi_dim, bias=False).weight
    """
    B, S, Dp = poi_history_feature.shape
    _, _, N, Du = user_history_feature.shape
    assert weight.shape == (Dp, Du), (weight.shape, (Dp, Du))
    M = B * S

    in_bytes = jnp.dtype(user_history_feature.dtype).itemsize
    w_bytes = jnp.dtype(weight.dtype).itemsize

    if tile_m is None:
        cap = _vmem_row_cap(N, Du, Dp, in_bytes, w_bytes, vmem_limit_bytes)
        tile_m, pad = _pick_tile_m(M, cap)
    else:
        pad = (-M) % tile_m

    m_padded = M + pad
    num_tiles = m_padded // tile_m

    # Keep storage dtype (no f32 upcast in HBM); flatten candidates into the lane
    # axis so each DMA'd block is lane-dense (last dim N*Du). Contiguous => free.
    poi = poi_history_feature.reshape(M, Dp)
    usr = user_history_feature.reshape(M, N * Du)
    if pad:
        poi = jnp.pad(poi, ((0, pad), (0, 0)))
        usr = jnp.pad(usr, ((0, pad), (0, 0)))
    valid_rows = M if pad else None

    # seg[d, n] = 1 if d belongs to candidate n's Du-chunk.
    seg = (jnp.arange(N * Du, dtype=jnp.int32)[:, None] // Du
           == jnp.arange(N, dtype=jnp.int32)[None, :]).astype(jnp.float32)

    kernel = functools.partial(_cl_criterion_kernel,
                               num_candidates=N, valid_rows=valid_rows)

    partials = pl.pallas_call(
        kernel,
        out_shape=jax.ShapeDtypeStruct((num_tiles, 8, 128), jnp.float32),
        grid_spec=pltpu.PrefetchScalarGridSpec(
            num_scalar_prefetch=0,
            grid=(num_tiles,),
            in_specs=[
                pl.BlockSpec((tile_m, Dp), lambda i: (i, 0)),
                pl.BlockSpec((tile_m, N * Du), lambda i: (i, 0)),
                pl.BlockSpec((Dp, Du), lambda i: (0, 0)),      # weight: resident
                pl.BlockSpec((N * Du, N), lambda i: (0, 0)),   # seg: resident
            ],
            out_specs=pl.BlockSpec((1, 8, 128), lambda i: (i, 0, 0)),
        ),
        compiler_params=pltpu.CompilerParams(
            dimension_semantics=("parallel",),      # independent per-tile partials
            vmem_limit_bytes=vmem_limit_bytes,
        ),
    )(poi, usr, weight, seg)

    # Final mean over all (true) rows; per-tile partial sums reduced in XLA.
    return jnp.sum(partials[:, 0, 0]) / jnp.float32(M)


def _reference_loss(poi, usr, weight):
    """Pure-JAX replica of the PyTorch forward (for verification)."""
    k = jnp.einsum("bsnu,pu->bsnp", usr, weight)          # linear, no bias
    logits = jnp.einsum("bsp,bsnp->bsn", poi, k)          # col 0 = positive
    logits = logits.reshape(-1, logits.shape[-1])
    lse = jax.scipy.special.logsumexp(logits, axis=-1)
    return jnp.mean(lse - logits[:, 0])                   # CE with labels == 0


if __name__ == "__main__":
    # Small, deterministic shapes consistent with the module's forward:
    B, S, N = 2, 8, 4              # N = 1 positive + 3 negatives
    user_dim, poi_dim = 32, 64     # distinct dims to exercise the projection shape

    key = jax.random.PRNGKey(0)
    k_poi, k_usr, k_w = jax.random.split(key, 3)

    poi_history_feature = jax.random.normal(k_poi, (B, S, poi_dim), jnp.float32)
    user_history_feature = jax.random.normal(k_usr, (B, S, N, user_dim), jnp.float32)
    # nn.Linear(user_dim, poi_dim, bias=False).weight -> [poi_dim, user_dim]
    weight = jax.random.normal(k_w, (poi_dim, user_dim), jnp.float32) * 0.1

    loss = cl_criterion_loss(poi_history_feature, user_history_feature, weight)
    loss = jax.block_until_ready(loss)
    ref = _reference_loss(poi_history_feature, user_history_feature, weight)
    assert jnp.allclose(loss, ref, atol=1e-4, rtol=1e-4), (loss, ref)

    # Also exercise the zero-pad + in-kernel row-mask path (M not divisible by tile).
    B2, S2 = 3, 5                  # M = 15, forced tile_m = 8 -> 1 padded row
    poi2 = jax.random.normal(k_poi, (B2, S2, poi_dim), jnp.float32)
    usr2 = jax.random.normal(k_usr, (B2, S2, N, user_dim), jnp.float32)
    loss2 = cl_criterion_loss(poi2, usr2, weight, tile_m=8)
    loss2 = jax.block_until_ready(loss2)
    ref2 = _reference_loss(poi2, usr2, weight)
    assert jnp.allclose(loss2, ref2, atol=1e-4, rtol=1e-4), (loss2, ref2)

    print("KERNEL_OK")
</pallas_src>

<mosaic_0001>
module attributes {stable_mosaic.version = 11 : i64} {
  func.func @_cl_criterion_kernel(%arg0: i32, %arg1: memref<16x64xf32, #tpu.memory_space<vmem>>, %arg2: memref<16x128xf32, #tpu.memory_space<vmem>>, %arg3: memref<64x32xf32, #tpu.memory_space<vmem>>, %arg4: memref<128x4xf32, #tpu.memory_space<vmem>>, %arg5: memref<1x8x128xf32, #tpu.memory_space<vmem>>) attributes {dimension_semantics = [#tpu.dimension_semantics<parallel>], iteration_bounds = array<i64: 1>, scalar_prefetch = 0 : i64, scratch_operands = 0 : i64, tpu.core_type = #tpu.core_type<tc>, window_params = [{transform_indices = @transform_0, window_bounds = array<i64: 16, 64>}, {transform_indices = @transform_1, window_bounds = array<i64: 16, 128>}, {pipeline_mode = #tpu.pipeline_mode<synchronous>, transform_indices = @transform_2, window_bounds = array<i64: 64, 32>}, {pipeline_mode = #tpu.pipeline_mode<synchronous>, transform_indices = @transform_3, window_bounds = array<i64: 128, 4>}, {transform_indices = @transform_4, window_bounds = array<i64: 1, 8, 128>}]} {
    %c0 = arith.constant 0 : index
    %c0_0 = arith.constant 0 : index
    %0 = vector.load %arg1[%c0, %c0_0] : memref<16x64xf32, #tpu.memory_space<vmem>>, vector<16x64xf32>
    %c0_1 = arith.constant 0 : index
    %c0_2 = arith.constant 0 : index
    %1 = vector.load %arg3[%c0_1, %c0_2] : memref<64x32xf32, #tpu.memory_space<vmem>>, vector<64x32xf32>
    %cst = arith.constant dense<0.000000e+00> : vector<16x32xf32>
    %2 = tpu.matmul %0, %1, %cst {dimension_numbers = #tpu.dot_dimension_numbers<[1], [0], [0], [1], [0, 0, 1, 1], [], []>} : vector<16x64xf32>, vector<64x32xf32>, vector<16x32xf32> -> vector<16x32xf32>
    %c0_3 = arith.constant 0 : index
    %c0_4 = arith.constant 0 : index
    %3 = vector.load %arg2[%c0_3, %c0_4] : memref<16x128xf32, #tpu.memory_space<vmem>>, vector<16x128xf32>
    %4 = tpu.concatenate %2, %2, %2, %2 in 1 : vector<16x32xf32>, vector<16x32xf32>, vector<16x32xf32>, vector<16x32xf32> -> vector<16x128xf32>
    %5 = arith.mulf %3, %4 : vector<16x128xf32>
    %c0_5 = arith.constant 0 : index
    %c0_6 = arith.constant 0 : index
    %6 = vector.load %arg4[%c0_5, %c0_6] : memref<128x4xf32, #tpu.memory_space<vmem>>, vector<128x4xf32>
    %cst_7 = arith.constant dense<0.000000e+00> : vector<16x4xf32>
    %7 = tpu.matmul %5, %6, %cst_7 {dimension_numbers = #tpu.dot_dimension_numbers<[1], [0], [0], [1], [0, 0, 1, 1], [], []>} : vector<16x128xf32>, vector<128x4xf32>, vector<16x4xf32> -> vector<16x4xf32>
    %cst_8 = arith.constant dense<0xFF800000> : vector<16xf32>
    %8 = vector.multi_reduction <maximumf>, %7, %cst_8 [1] : vector<16x4xf32> to vector<16xf32>
    %9 = vector.shape_cast %8 : vector<16xf32> to vector<16x1xf32>
    %10 = vector.broadcast %9 : vector<16x1xf32> to vector<16x4xf32>
    %11 = arith.subf %7, %10 : vector<16x4xf32>
    %12 = math.exp %11 : vector<16x4xf32>
    %cst_9 = arith.constant dense<0.000000e+00> : vector<16xf32>
    %13 = vector.multi_reduction <add>, %12, %cst_9 [1] : vector<16x4xf32> to vector<16xf32>
    %14 = vector.shape_cast %13 : vector<16xf32> to vector<16x1xf32>
    %15 = math.log %14 : vector<16x1xf32>
    %16 = arith.addf %9, %15 : vector<16x1xf32>
    %17 = vector.extract_strided_slice %7 {offsets = [0, 0], sizes = [16, 1], strides = [1, 1]} : vector<16x4xf32> to vector<16x1xf32>
    %18 = arith.subf %16, %17 : vector<16x1xf32>
    %19 = vector.shape_cast %18 : vector<16x1xf32> to vector<1x16x1xf32>
    %cst_10 = arith.constant dense<0.000000e+00> : vector<1xf32>
    %20 = vector.multi_reduction <add>, %19, %cst_10 [1, 2] : vector<1x16x1xf32> to vector<1xf32>
    %21 = vector.shape_cast %20 : vector<1xf32> to vector<1x1x1xf32>
    %22 = vector.extract %21[0, 0, 0] : f32 from vector<1x1x1xf32>
    %23 = vector.broadcast %22 : f32 to vector<1x8x128xf32>
    %c0_11 = arith.constant 0 : index
    %c0_12 = arith.constant 0 : index
    %c0_13 = arith.constant 0 : index
    %24 = vector.load %arg5[%c0_11, %c0_12, %c0_13] : memref<1x8x128xf32, #tpu.memory_space<vmem>>, vector<1x8x128xf32>
    tpu.vector_store %arg5[%c0_11, %c0_12, %c0_13], %23 {strides = array<i32>} : memref<1x8x128xf32, #tpu.memory_space<vmem>>, vector<1x8x128xf32>,
    return
  }
  func.func @transform_0(%arg0: i32) -> (i32, i32) {
    %c0_i32 = arith.constant 0 : i32
    %c0_i32_0 = arith.constant 0 : i32
    return %arg0, %c0_i32 : i32, i32
  }
  func.func @transform_1(%arg0: i32) -> (i32, i32) {
    %c0_i32 = arith.constant 0 : i32
    %c0_i32_0 = arith.constant 0 : i32
    return %arg0, %c0_i32 : i32, i32
  }
  func.func @transform_2(%arg0: i32) -> (i32, i32) {
    %c0_i32 = arith.constant 0 : i32
    %c0_i32_0 = arith.constant 0 : i32
    %c0_i32_1 = arith.constant 0 : i32
    return %c0_i32, %c0_i32_0 : i32, i32
  }
  func.func @transform_3(%arg0: i32) -> (i32, i32) {
    %c0_i32 = arith.constant 0 : i32
    %c0_i32_0 = arith.constant 0 : i32
    %c0_i32_1 = arith.constant 0 : i32
    return %c0_i32, %c0_i32_0 : i32, i32
  }
  func.func @transform_4(%arg0: i32) -> (i32, i32, i32) {
    %c0_i32 = arith.constant 0 : i32
    %c0_i32_0 = arith.constant 0 : i32
    %c0_i32_1 = arith.constant 0 : i32
    return %arg0, %c0_i32, %c0_i32_0 : i32, i32, i32
  }
}

</mosaic_0001>

<llo_original>
// kernel: tpu_custom_call.1
$region0: #{tpu_custom_call.1}
  #allocation0 [shape = 'u32[]', space=smem, size = 0x4, offset = 0x4, fixed_abs, tag = 'smem constant byte address 0x4 - core index']
  #allocation1 [shape = 'u32[72,128]{1,0:T(1,128)}', space=vmem, size = 0x9000, scoped, tag = 'internal scratch']
  %s0 = inlined_call_operand.vmem [shape: f32[16,64], index: 0, kind: input, shape index: {}]
  %s1 = inlined_call_operand.vmem [shape: f32[16,128], index: 1, kind: input, shape index: {}]
  %s2 = inlined_call_operand.vmem [shape: f32[64,32], index: 2, kind: input, shape index: {}]
  %s3 = inlined_call_operand.vmem [shape: f32[128,4], index: 3, kind: input, shape index: {}]
  %s4 = inlined_call_operand.hbm [shape: f32[1,8,128], index: 4, kind: output, shape index: {}]
  %s5 = sld [smem:[#allocation0]]
  $region26: #{tpu_custom_call.1} parent=0
    _
  %s7 = ssub.s32 1, %s5
  %s8 = scalar_select 0, %s7, %s5
  $region1: #{tpu_custom_call.1} parent=0
    #allocation2 [shape = 'u8[4096]{0}', space=vmem, size = 0x1000, scoped, tag = 'output window, operand 0, single buffered']
    #allocation3 [shape = 's32[1]{0}', space=sflag, size = 0x4, scoped, tag = 'scoped memory for tpu_custom_call.1']
    %9 = vsyncpa [#allocation3], 0
    // Predicated region
    $region2: #{tpu_custom_call.1} parent=1 // pred_check
      _
    $region3: #{tpu_custom_call.1} parent=1 // pred_check_branch
      %11 = sbr.rel (0) target = $region5
    $region4: #{tpu_custom_call.1} parent=1 // pred_region
      _
    $region5: #{tpu_custom_call.1} parent=1 // pred_fallthru
      _
    // Predicated region
    $region6: #{tpu_custom_call.1} parent=1 // pred_check
      _
    $region7: #{tpu_custom_call.1} parent=1 // pred_check_branch
      %13 = sbr.rel (0) target = $region9
    $region8: #{tpu_custom_call.1} parent=1 // pred_region
      _
    $region9: #{tpu_custom_call.1} parent=1 // pred_fallthru
      _
    // Predicated region
    $region10: #{tpu_custom_call.1} parent=1 // pred_check
      _
    $region11: #{tpu_custom_call.1} parent=1 // pred_check_branch
      %15 = sbr.rel (0) target = $region13
    $region12: #{tpu_custom_call.1} parent=1 // pred_region
      _
    $region13: #{tpu_custom_call.1} parent=1 // pred_fallthru
      _
    // Predicated region
    $region14: #{tpu_custom_call.1} parent=1 // pred_check
      _
    $region15: #{tpu_custom_call.1} parent=1 // pred_check_branch
      %17 = sbr.rel (0) target = $region17
    $region16: #{tpu_custom_call.1} parent=1 // pred_region
      _
    $region17: #{tpu_custom_call.1} parent=1 // pred_fallthru
      _
    %v18 = vld [vmem:[%s0] sm:$0xff]
    %v19 = vld [vmem:[%s0 + $0x8] sm:$0xff]
    %v20 = vld [vmem:[%s2] sm:$0xff]
    %v21 = vld [vmem:[%s2 + $0x8] sm:$0xff]
    %v22 = vld [vmem:[%s2 + $0x10] sm:$0xff]
    %v23 = vld [vmem:[%s2 + $0x18] sm:$0xff]
    %v24 = vld [vmem:[%s2 + $0x20] sm:$0xff]
    %v25 = vld [vmem:[%s2 + $0x28] sm:$0xff]
    %v26 = vld [vmem:[%s2 + $0x30] sm:$0xff]
    %v27 = vld [vmem:[%s2 + $0x38] sm:$0xff]
    %vm28 = vcmask 523264
    %v30 = vsel %vm28, %v18, 0
    %v33 = vsel %vm28, %v19, 0
    %35 = vmatpush.msra.mxu0 0.0
    %36 = vmatpush.msra.mxu0 0.0
    %37 = vmatpush.msra.mxu0 0.0
    %38 = vmatpush.msra.mxu0 0.0
    %39 = vmatpush.msra.mxu0 0.0
    %40 = vmatpush.msra.mxu0 0.0
    %41 = vmatpush.msra.mxu0 0.0
    %42 = vmatpush.msra.mxu0 0.0
    %43 = vmatpush.msra.mxu0 %v27
    %44 = vmatpush.msra.mxu0 %v26
    %45 = vmatpush.msra.mxu0 %v25
    %46 = vmatpush.msra.mxu0 %v24
    %47 = vmatpush.msra.mxu0 %v23
    %48 = vmatpush.msra.mxu0 %v22
    %49 = vmatpush.msra.mxu0 %v21
    %50 = vmatpush.msra.mxu0 %v20
    %51 = vmatmul.f32.gmra.mxu0 %v30
    %v52 = vpop.f32.mrf.mxu0
    %v53 = vadd.f32 0.0, %v52
    %54 = vmatmul.f32.gmra.mxu0 %v33
    %v55 = vpop.f32.mrf.mxu0
    %v56 = vadd.f32 0.0, %v55
    %57 = vdwg.mxu0
    %v58 = vld [vmem:[%s1] sm:$0xff]
    %v59 = vld [vmem:[%s1 + $0x8] sm:$0xff]
    %62 = vrot.lane.b32.xlu0 %v53, 32
    %v63 = vpop.permute.xlu0 %62
    %64 = vrot.lane.b32.xlu0 %v56, 32
    %v65 = vpop.permute.xlu0 %64
    %68 = vrot.lane.b32.xlu0 %v53, 64
    %v69 = vpop.permute.xlu0 %68
    %70 = vrot.lane.b32.xlu0 %v56, 64
    %v71 = vpop.permute.xlu0 %70
    %74 = vrot.lane.b32.xlu0 %v53, 96
    %v75 = vpop.permute.xlu0 %74
    %76 = vrot.lane.b32.xlu0 %v56, 96
    %v77 = vpop.permute.xlu0 %76
    %vm80 = vcmask 261120
    %v81 = vsel %vm80, %v53, %v63
    %v82 = vsel %vm80, %v56, %v65
    %v83 = vsel %vm28, %v81, %v69
    %v84 = vsel %vm28, %v82, %v71
    %vm85 = vcmask 785408
    %v86 = vsel %vm85, %v83, %v75
    %v87 = vsel %vm85, %v84, %v77
    %v88 = vmul.f32 %v58, %v86
    %v89 = vmul.f32 %v59, %v87
    %v90 = vld [vmem:[%s3] sm:$0xff]
    %v91 = vld [vmem:[%s3 + $0x8] sm:$0xff]
    %v92 = vld [vmem:[%s3 + $0x10] sm:$0xff]
    %v93 = vld [vmem:[%s3 + $0x18] sm:$0xff]
    %v94 = vld [vmem:[%s3 + $0x20] sm:$0xff]
    %v95 = vld [vmem:[%s3 + $0x28] sm:$0xff]
    %v96 = vld [vmem:[%s3 + $0x30] sm:$0xff]
    %v97 = vld [vmem:[%s3 + $0x38] sm:$0xff]
    %v98 = vld [vmem:[%s3 + $0x40] sm:$0xff]
    %v99 = vld [vmem:[%s3 + $0x48] sm:$0xff]
    %v100 = vld [vmem:[%s3 + $0x50] sm:$0xff]
    %v101 = vld [vmem:[%s3 + $0x58] sm:$0xff]
    %v102 = vld [vmem:[%s3 + $0x60] sm:$0xff]
    %v103 = vld [vmem:[%s3 + $0x68] sm:$0xff]
    %v104 = vld [vmem:[%s3 + $0x70] sm:$0xff]
    %v105 = vld [vmem:[%s3 + $0x78] sm:$0xff]
    %106 = vmatpush.msra.mxu0 %v105
    %107 = vmatpush.msra.mxu0 %v104
    %108 = vmatpush.msra.mxu0 %v103
    %109 = vmatpush.msra.mxu0 %v102
    %110 = vmatpush.msra.mxu0 %v101
    %111 = vmatpush.msra.mxu0 %v100
    %112 = vmatpush.msra.mxu0 %v99
    %113 = vmatpush.msra.mxu0 %v98
    %114 = vmatpush.msra.mxu0 %v97
    %115 = vmatpush.msra.mxu0 %v96
    %116 = vmatpush.msra.mxu0 %v95
    %117 = vmatpush.msra.mxu0 %v94
    %118 = vmatpush.msra.mxu0 %v93
    %119 = vmatpush.msra.mxu0 %v92
    %120 = vmatpush.msra.mxu0 %v91
    %121 = vmatpush.msra.mxu0 %v90
    %122 = vmatmul.f32.gmra.mxu0 %v88
    %v123 = vpop.f32.mrf.mxu0
    %v124 = vadd.f32 0.0, %v123
    %125 = vmatmul.f32.gmra.mxu0 %v89
    %v126 = vpop.f32.mrf.mxu0
    %v127 = vadd.f32 0.0, %v126
    %128 = vdwg.mxu0
    %vm129 = vcmask 31744
    %v130 = vsel %vm129, %v124, -inf
    %131 = vmax.xlane.f32.xlu0 %v130
    %v132 = vpop.xlane.xlu0 %131
    %v133 = vsel %vm129, %v127, -inf
    %134 = vmax.xlane.f32.xlu0 %v133
    %v135 = vpop.xlane.xlu0 %134
    %v136 = vsub.f32 %v124, %v132
    %v137 = vsub.f32 %v127, %v135
    %v138 = vmul.f32 %v136, 1.442695
    %v139 = vpow.pop %v138
    %v140 = vmul.f32 %v137, 1.442695
    %v141 = vpow.pop %v140
    %v142 = vsel %vm129, %v139, 0.0
    %143 = vadd.xlane.f32.xlu0 %v142
    %v144 = vpop.xlane.xlu0 %143
    %v145 = vsel %vm129, %v141, 0.0
    %146 = vadd.xlane.f32.xlu0 %v145
    %v147 = vpop.xlane.xlu0 %146
    %v148 = vlog2.pop %v144
    %v149 = vmul.f32 %v148, 0.6931472
    %v150 = vlog2.pop %v147
    %v151 = vmul.f32 %v150, 0.6931472
    %v152 = vadd.f32 %v132, %v149
    %v153 = vadd.f32 %v135, %v151
    %v154 = vsub.f32 %v152, %v124
    %v155 = vsub.f32 %v153, %v127
    %vm156 = vcmask 7168
    %v157 = vsel %vm156, %v154, 0.0
    %v158 = vsel %vm156, %v155, 0.0
    %v159 = vadd.f32 %v157, %v158
    %160 = vadd.xlane.f32.xlu0 %v159
    %v161 = vpop.xlane.xlu0 %160
    %v162 = vrot.slane %v161, 4
    %v163 = vadd.f32 %v161, %v162
    %v164 = vrot.slane %v163, 2
    %v165 = vadd.f32 %v163, %v164
    %v166 = vrot.slane %v165, 1
    %v167 = vadd.f32 %v165, %v166
    %s168 = vtos %v167
    %v169 = vstv %s168
    %170 = vst [vmem:[#allocation2] sm:$0xff] %v169
    // Predicated region
    $region18: #{tpu_custom_call.1} parent=1 // pred_check
      _
    $region19: #{tpu_custom_call.1} parent=1 // pred_check_branch
      %172 = sbr.rel (0) target = $region21
    $region20: #{tpu_custom_call.1} parent=1 // pred_region
      %174 = vsyncadd [#allocation3], 0
      %s176 = sshll.u32 [#allocation2], 4
      %s177 = int_to_ptr.vmem [resolvable:$true] %s176
      %s178 = sshll.u32 %s4, 4
      %s179 = int_to_ptr.hbm [resolvable:$true] %s178
      %181 = dma.vmem_to_hbm [thread:$0]  %s177, 128, %s179, [#allocation3]
    $region21: #{tpu_custom_call.1} parent=1 // pred_fallthru
      _
    // Predicated region
    $region22: #{tpu_custom_call.1} parent=1 // pred_check
      _
    $region23: #{tpu_custom_call.1} parent=1 // pred_check_branch
      %183 = sbr.rel (0) target = $region25
    $region24: #{tpu_custom_call.1} parent=1 // pred_region
      %185 = dma.done [#allocation3], 128
    $region25: #{tpu_custom_call.1} parent=1 // pred_fallthru
      _
    %186 = vsyncpa [#allocation3], 1

</llo_original>
